<compile_context>
chip_gen: v7x
topology: tpu7x:2x2x1
jax: 0.10.0
libtpu: 0.0.40
codegen_flags: <defaults>
</compile_context>

<pallas_src>
import functools

import jax
import jax.numpy as jnp
from jax.experimental import pallas as pl
from jax.experimental.pallas import tpu as pltpu

LEAKY_SLOPE = 0.01   # nn.LeakyReLU default
IN_EPS = 1e-5        # nn.InstanceNorm2d default


# ----------------------------- kernel helpers -----------------------------
def _leaky(x):
    return jnp.where(x >= 0, x, LEAKY_SLOPE * x)


def _stable_sigmoid(z):
    # exp() only ever sees non-positive arguments -> no inf intermediates.
    t = jnp.exp(-jnp.abs(z))
    return jnp.where(z >= 0, 1.0 / (1.0 + t), t / (1.0 + t))


def _se_gate(pooled_col, w1t, b1_row, w2, b2_col):
    """SE MLP on the VPU (no MXU, no transposes).

    pooled_col: (C, 1)      w1t: (C, hidden)  (= Linear1.weight.T)
    b1_row:     (1, hidden) w2:  (C, hidden)  (= Linear2.weight)   b2_col: (C, 1)
    returns the per-channel gate, shape (C, 1).
    """
    h = jnp.sum(w1t * pooled_col, axis=0, keepdims=True) + b1_row   # (1, hidden)
    h = jnp.maximum(h, 0.0)
    z = jnp.sum(w2 * h, axis=1, keepdims=True) + b2_col             # (C, 1)
    return _stable_sigmoid(z)


# ------------------------------- kernels ----------------------------------
def _se_scale_kernel(x_ref, w1t_ref, b1_ref, w2_ref, b2_ref, o_ref):
    # stride == 1:  out = x * SE(x).   x tile is (C, HW), lane-dense.
    x = x_ref[0]                                                  # (C, HW)
    pooled = jnp.mean(x, axis=1, keepdims=True)                   # (C, 1)
    s = _se_gate(pooled, w1t_ref[...], b1_ref[...], w2_ref[...], b2_ref[...])
    o_ref[0] = x * s


def _se_reduce_scale_kernel(x_ref, w1t_ref, b1_ref, w2_ref, b2_ref,
                            wc1_ref, wc2_ref, se_ref, so_ref, o_ref):
    # stride > 1:  out = FactorizedReduce(x) * SE(x)
    #
    #  x_ref: (1, C, H/2, 2W)  "row-pair" view of NCHW x (free reshape):
    #         lane k in [0, W)  -> x[c, 2i, k]      (even row)
    #         lane k in [W, 2W) -> x[c, 2i+1, k-W]  (odd row)
    #  se_ref/so_ref: (2W, W/2) 0/1 selection matrices (even-row/even-col and
    #         odd-row/odd-col pixel pick), applied on the MXU.
    #  o_ref: (1, 2, C/2, H/2*W/2) -- contiguous reinterpretation of the final NCHW
    #         output (half 0 = conv_1 channels, half 1 = conv_2 channels); rows are
    #         written un-normalized during the loop and fixed up in a VMEM-only pass.
    C = x_ref.shape[1]
    H2 = x_ref.shape[2]
    W2 = se_ref.shape[1]
    C2 = wc1_ref.shape[0]
    inv_hw = 1.0 / float(x_ref.shape[2] * x_ref.shape[3])     # 1 / (H*W)
    inv_sp = 1.0 / float(H2 * W2)                              # 1 / (H/2 * W/2)

    wc1 = wc1_ref[...]
    wc2 = wc2_ref[...]
    sel_e = se_ref[...]
    sel_o = so_ref[...]

    psum = jnp.zeros((C, 1), jnp.float32)    # SE pool accumulator (raw x)
    s1 = jnp.zeros((C2, 1), jnp.float32)     # per-channel sum / sum-of-squares for IN
    q1 = jnp.zeros((C2, 1), jnp.float32)
    s2 = jnp.zeros((C2, 1), jnp.float32)
    q2 = jnp.zeros((C2, 1), jnp.float32)

    # Static (compile-time) loop over output rows: H2 is small and all per-iteration
    # live values are tiny (<= (C, 2W)); heavy data stays in the x/output VMEM blocks.
    for i in range(H2):
        rp = x_ref[0, :, i, :]                                          # (C, 2W) row pair
        psum = psum + jnp.sum(rp, axis=1, keepdims=True)                # pool on raw x
        a = _leaky(rp)
        p1 = jnp.dot(a, sel_e, preferred_element_type=jnp.float32)      # (C, W2) even/even
        p2 = jnp.dot(a, sel_o, preferred_element_type=jnp.float32)      # (C, W2) odd/odd
        y1 = jnp.dot(wc1, p1, preferred_element_type=jnp.float32)       # (C2, W2) conv_1
        y2 = jnp.dot(wc2, p2, preferred_element_type=jnp.float32)       # (C2, W2) conv_2
        o_ref[0, 0, :, i * W2:(i + 1) * W2] = y1                        # un-normalized
        o_ref[0, 1, :, i * W2:(i + 1) * W2] = y2
        s1 = s1 + jnp.sum(y1, axis=1, keepdims=True)
        q1 = q1 + jnp.sum(y1 * y1, axis=1, keepdims=True)
        s2 = s2 + jnp.sum(y2, axis=1, keepdims=True)
        q2 = q2 + jnp.sum(y2 * y2, axis=1, keepdims=True)

    pooled = psum * inv_hw                                              # (C, 1)
    gate = _se_gate(pooled, w1t_ref[...], b1_ref[...], w2_ref[...], b2_ref[...])

    # InstanceNorm2d(affine=False) is per-channel, so each conv half is normalized
    # independently (identical to normalizing the channel concat).
    m1 = s1 * inv_sp
    v1 = jnp.maximum(q1 * inv_sp - m1 * m1, 0.0)
    m2 = s2 * inv_sp
    v2 = jnp.maximum(q2 * inv_sp - m2 * m2, 0.0)
    sc1 = jax.lax.rsqrt(v1 + IN_EPS) * gate[:C2]                        # (C2, 1)
    sc2 = jax.lax.rsqrt(v2 + IN_EPS) * gate[C2:]                        # (C2, 1)

    # Second, VMEM-only pass: InstanceNorm + SE rescale on the lane-dense output halves.
    o_ref[0, 0] = (o_ref[0, 0] - m1) * sc1
    o_ref[0, 1] = (o_ref[0, 1] - m2) * sc2


# ------------------------------- wrapper -----------------------------------
def _compiler_params(block_bytes):
    # Budget for double-buffered input+output blocks (+ weights / compiler scratch slack).
    need = int(2 * block_bytes * 1.3) + (4 << 20)
    limit = int(min(100 << 20, max(32 << 20, need)))
    return pltpu.CompilerParams(dimension_semantics=("parallel",),
                                vmem_limit_bytes=limit)


@functools.partial(jax.jit, static_argnames=("stride",))
def se_block_forward(x_nchw, w1, b1, w2, b2, wc1=None, wc2=None, *, stride=1):
    """SEBlock forward.
    x: (N, C, H, W) f32.  w1: (hidden, C), b1: (hidden,), w2: (C, hidden), b2: (C,)
    wc1/wc2: (C//2, C) 1x1-conv weights (only used when stride > 1).
    Returns (N, C, H, W) for stride=1, else (N, C, H//2, W//2)."""
    N, C, H, W = x_nchw.shape
    HW = H * W
    hidden = w1.shape[0]

    # Weight layouts chosen so the SE MLP runs as pure VPU broadcast+reduce inside the kernel.
    w1t = w1.T                      # (C, hidden)
    b1r = b1.reshape(1, hidden)     # (1, hidden)
    b2c = b2.reshape(C, 1)          # (C, 1)

    full2d = lambda shape: pl.BlockSpec(shape, lambda n: (0, 0))

    if stride == 1:
        x2 = x_nchw.reshape(N, C, HW)                       # free reshape, lane-dense
        block_bytes = 2 * C * HW * 4                        # x block + out block per step
        out = pl.pallas_call(
            _se_scale_kernel,
            out_shape=jax.ShapeDtypeStruct((N, C, HW), jnp.float32),
            grid=(N,),
            in_specs=[pl.BlockSpec((1, C, HW), lambda n: (n, 0, 0)),
                      full2d((C, hidden)), full2d((1, hidden)),
                      full2d((C, hidden)), full2d((C, 1))],
            out_specs=pl.BlockSpec((1, C, HW), lambda n: (n, 0, 0)),
            compiler_params=_compiler_params(block_bytes),
        )(x2, w1t, b1r, w2, b2c)
        return out.reshape(N, C, H, W)

    assert H % 2 == 0 and W % 2 == 0 and C % 2 == 0, "FactorizedReduce path needs even C, H, W"
    H2, W2, C2 = H // 2, W // 2, C // 2

    # Free (metadata-only) "row-pair" view: lane axis = [even row | odd row].
    xv = x_nchw.reshape(N, C, H2, 2 * W)

    # 0/1 selection matrices: even-row/even-col pixels and odd-row/odd-col pixels.
    sel_e = jax.nn.one_hot(2 * jnp.arange(W2), 2 * W, dtype=jnp.float32).T          # (2W, W2)
    sel_o = jax.nn.one_hot(W + 1 + 2 * jnp.arange(W2), 2 * W, dtype=jnp.float32).T  # (2W, W2)

    block_bytes = (C * HW + 2 * C2 * H2 * W2) * 4           # x block + out block per step
    out = pl.pallas_call(
        _se_reduce_scale_kernel,
        out_shape=jax.ShapeDtypeStruct((N, 2, C2, H2 * W2), jnp.float32),
        grid=(N,),
        in_specs=[pl.BlockSpec((1, C, H2, 2 * W), lambda n: (n, 0, 0, 0)),
                  full2d((C, hidden)), full2d((1, hidden)),
                  full2d((C, hidden)), full2d((C, 1)),
                  full2d((C2, C)), full2d((C2, C)),
                  full2d((2 * W, W2)), full2d((2 * W, W2))],
        out_specs=pl.BlockSpec((1, 2, C2, H2 * W2), lambda n: (n, 0, 0, 0)),
        compiler_params=_compiler_params(block_bytes),
    )(xv, w1t, b1r, w2, b2c, wc1, wc2, sel_e, sel_o)

    # (N, 2, C/2, H2*W2) is a contiguous reinterpretation of (N, C, H2, W2): free reshape.
    return out.reshape(N, C, H2, W2)


# -------------------- pure-JAX reference (verification only) ----------------
def _ref_forward(x, w1, b1, w2, b2, wc1=None, wc2=None, stride=1):
    N, C, H, W = x.shape
    hp = jax.lax.Precision.HIGHEST
    pooled = x.reshape(N, C, -1).mean(axis=-1)                            # GlobalAvgPool
    h = jnp.maximum(jnp.dot(pooled, w1.T, precision=hp) + b1, 0.0)        # Linear + ReLU
    z = jnp.dot(h, w2.T, precision=hp) + b2                               # Linear
    s = (1.0 / (1.0 + jnp.exp(-z)))[:, :, None, None]                     # Sigmoid
    if stride > 1:
        a = jnp.where(x >= 0, x, LEAKY_SLOPE * x)
        x1 = a[:, :, ::2, ::2]
        x2 = a[:, :, 1::2, 1::2]
        y1 = jnp.einsum("oc,nchw->nohw", wc1, x1, precision=hp)
        y2 = jnp.einsum("oc,nchw->nohw", wc2, x2, precision=hp)
        y = jnp.concatenate([y1, y2], axis=1)
        mean = y.mean(axis=(2, 3), keepdims=True)
        var = ((y - mean) ** 2).mean(axis=(2, 3), keepdims=True)
        x = (y - mean) * jax.lax.rsqrt(var + IN_EPS)
    return x * s


if __name__ == "__main__":
    N, C, H, W = 2, 4, 16, 16
    r = 2
    hidden = max(1, C // r)

    key = jax.random.PRNGKey(0)
    ks = jax.random.split(key, 7)
    x = jax.random.normal(ks[0], (N, C, H, W), dtype=jnp.float32)
    # Synthetic parameters in PyTorch layouts: Linear weight (out, in); 1x1 conv (out, in).
    w1 = 0.5 * jax.random.normal(ks[1], (hidden, C), dtype=jnp.float32)
    b1 = 0.1 * jax.random.normal(ks[2], (hidden,), dtype=jnp.float32)
    w2 = 0.5 * jax.random.normal(ks[3], (C, hidden), dtype=jnp.float32)
    b2 = 0.1 * jax.random.normal(ks[4], (C,), dtype=jnp.float32)
    wc1 = 0.5 * jax.random.normal(ks[5], (C // 2, C), dtype=jnp.float32)
    wc2 = 0.5 * jax.random.normal(ks[6], (C // 2, C), dtype=jnp.float32)

    # stride = 1 (no pre_x): pure squeeze-excitation scaling (no matmuls -> tight tolerance).
    out1 = jax.block_until_ready(se_block_forward(x, w1, b1, w2, b2, stride=1))
    ref1 = jax.block_until_ready(_ref_forward(x, w1, b1, w2, b2, stride=1))
    assert out1.shape == (N, C, H, W), out1.shape
    err1 = float(jnp.max(jnp.abs(out1 - ref1)))
    assert jnp.allclose(out1, ref1, atol=1e-4, rtol=1e-4), err1

    # stride = 2: FactorizedReduce(x) then SE scaling.  Looser tolerance: the in-kernel MXU
    # matmuls may use default (bf16-pass) precision while the reference uses HIGHEST.
    out2 = jax.block_until_ready(se_block_forward(x, w1, b1, w2, b2, wc1, wc2, stride=2))
    ref2 = jax.block_until_ready(_ref_forward(x, w1, b1, w2, b2, wc1, wc2, stride=2))
    assert out2.shape == (N, C, H // 2, W // 2), out2.shape
    err2 = float(jnp.max(jnp.abs(out2 - ref2)))
    assert jnp.allclose(out2, ref2, atol=5e-3, rtol=5e-3), err2

    print("KERNEL_OK")
</pallas_src>

<mosaic_0001>
module attributes {stable_mosaic.version = 11 : i64} {
  func.func @_se_scale_kernel(%arg0: i32, %arg1: memref<1x4x256xf32, #tpu.memory_space<vmem>>, %arg2: memref<4x2xf32, #tpu.memory_space<vmem>>, %arg3: memref<1x2xf32, #tpu.memory_space<vmem>>, %arg4: memref<4x2xf32, #tpu.memory_space<vmem>>, %arg5: memref<4x1xf32, #tpu.memory_space<vmem>>, %arg6: memref<1x4x256xf32, #tpu.memory_space<vmem>>) attributes {dimension_semantics = [#tpu.dimension_semantics<parallel>], iteration_bounds = array<i64: 2>, scalar_prefetch = 0 : i64, scratch_operands = 0 : i64, tpu.core_type = #tpu.core_type<tc>, window_params = [{transform_indices = @transform_0, window_bounds = array<i64: 1, 4, 256>}, {pipeline_mode = #tpu.pipeline_mode<synchronous>, transform_indices = @transform_1, window_bounds = array<i64: 4, 2>}, {pipeline_mode = #tpu.pipeline_mode<synchronous>, transform_indices = @transform_2, window_bounds = array<i64: 1, 2>}, {pipeline_mode = #tpu.pipeline_mode<synchronous>, transform_indices = @transform_3, window_bounds = array<i64: 4, 2>}, {pipeline_mode = #tpu.pipeline_mode<synchronous>, transform_indices = @transform_4, window_bounds = array<i64: 4, 1>}, {transform_indices = @transform_5, window_bounds = array<i64: 1, 4, 256>}]} {
    %c0 = arith.constant 0 : index
    %c0_0 = arith.constant 0 : index
    %c0_1 = arith.constant 0 : index
    %0 = vector.load %arg1[%c0, %c0_0, %c0_1] : memref<1x4x256xf32, #tpu.memory_space<vmem>>, vector<1x4x256xf32>
    %1 = vector.shape_cast %0 : vector<1x4x256xf32> to vector<4x256xf32>
    %cst = arith.constant dense<0.000000e+00> : vector<4xf32>
    %2 = vector.multi_reduction <add>, %1, %cst [1] : vector<4x256xf32> to vector<4xf32>
    %3 = vector.shape_cast %2 : vector<4xf32> to vector<4x1xf32>
    %cst_2 = arith.constant 2.560000e+02 : f32
    %4 = vector.broadcast %cst_2 : f32 to vector<4x1xf32>
    %5 = arith.divf %3, %4 : vector<4x1xf32>
    %c0_3 = arith.constant 0 : index
    %c0_4 = arith.constant 0 : index
    %6 = vector.load %arg2[%c0_3, %c0_4] : memref<4x2xf32, #tpu.memory_space<vmem>>, vector<4x2xf32>
    %c0_5 = arith.constant 0 : index
    %c0_6 = arith.constant 0 : index
    %7 = vector.load %arg3[%c0_5, %c0_6] : memref<1x2xf32, #tpu.memory_space<vmem>>, vector<1x2xf32>
    %c0_7 = arith.constant 0 : index
    %c0_8 = arith.constant 0 : index
    %8 = vector.load %arg4[%c0_7, %c0_8] : memref<4x2xf32, #tpu.memory_space<vmem>>, vector<4x2xf32>
    %c0_9 = arith.constant 0 : index
    %c0_10 = arith.constant 0 : index
    %9 = vector.load %arg5[%c0_9, %c0_10] : memref<4x1xf32, #tpu.memory_space<vmem>>, vector<4x1xf32>
    %10 = vector.broadcast %5 : vector<4x1xf32> to vector<4x2xf32>
    %11 = arith.mulf %6, %10 : vector<4x2xf32>
    %cst_11 = arith.constant dense<0.000000e+00> : vector<2xf32>
    %12 = vector.multi_reduction <add>, %11, %cst_11 [0] : vector<4x2xf32> to vector<2xf32>
    %13 = vector.shape_cast %12 : vector<2xf32> to vector<1x2xf32>
    %14 = arith.addf %13, %7 : vector<1x2xf32>
    %cst_12 = arith.constant 0.000000e+00 : f32
    %15 = vector.broadcast %cst_12 : f32 to vector<1x2xf32>
    %16 = arith.maximumf %14, %15 : vector<1x2xf32>
    %17 = vector.broadcast %16 : vector<1x2xf32> to vector<4x2xf32>
    %18 = arith.mulf %8, %17 : vector<4x2xf32>
    %cst_13 = arith.constant dense<0.000000e+00> : vector<4xf32>
    %19 = vector.multi_reduction <add>, %18, %cst_13 [1] : vector<4x2xf32> to vector<4xf32>
    %20 = vector.shape_cast %19 : vector<4xf32> to vector<4x1xf32>
    %21 = arith.addf %20, %9 : vector<4x1xf32>
    %22 = math.absf %21 : vector<4x1xf32>
    %cst_14 = arith.constant 0.000000e+00 : f32
    %23 = vector.broadcast %cst_14 : f32 to vector<4x1xf32>
    %24 = arith.subf %23, %22 : vector<4x1xf32>
    %25 = math.exp %24 : vector<4x1xf32>
    %cst_15 = arith.constant 0.000000e+00 : f32
    %26 = vector.broadcast %cst_15 : f32 to vector<4x1xf32>
    %27 = arith.cmpf oge, %21, %26 : vector<4x1xf32>
    %cst_16 = arith.constant 1.000000e+00 : f32
    %28 = vector.broadcast %cst_16 : f32 to vector<4x1xf32>
    %29 = arith.addf %28, %25 : vector<4x1xf32>
    %cst_17 = arith.constant 1.000000e+00 : f32
    %30 = vector.broadcast %cst_17 : f32 to vector<4x1xf32>
    %31 = arith.divf %30, %29 : vector<4x1xf32>
    %cst_18 = arith.constant 1.000000e+00 : f32
    %32 = vector.broadcast %cst_18 : f32 to vector<4x1xf32>
    %33 = arith.addf %32, %25 : vector<4x1xf32>
    %34 = arith.divf %25, %33 : vector<4x1xf32>
    %35 = arith.select %27, %31, %34 : vector<4x1xi1>, vector<4x1xf32>
    %36 = vector.broadcast %35 : vector<4x1xf32> to vector<4x256xf32>
    %37 = arith.mulf %1, %36 : vector<4x256xf32>
    %c0_19 = arith.constant 0 : index
    %c0_20 = arith.constant 0 : index
    %c0_21 = arith.constant 0 : index
    %38 = vector.load %arg6[%c0_19, %c0_20, %c0_21] : memref<1x4x256xf32, #tpu.memory_space<vmem>>, vector<1x4x256xf32>
    %39 = vector.shape_cast %38 : vector<1x4x256xf32> to vector<4x256xf32>
    %40 = vector.shape_cast %37 : vector<4x256xf32> to vector<1x4x256xf32>
    tpu.vector_store %arg6[%c0_19, %c0_20, %c0_21], %40 {strides = array<i32>} : memref<1x4x256xf32, #tpu.memory_space<vmem>>, vector<1x4x256xf32>,
    return
  }
  func.func @transform_0(%arg0: i32) -> (i32, i32, i32) {
    %c0_i32 = arith.constant 0 : i32
    %c0_i32_0 = arith.constant 0 : i32
    %c0_i32_1 = arith.constant 0 : i32
    return %arg0, %c0_i32, %c0_i32_0 : i32, i32, i32
  }
  func.func @transform_1(%arg0: i32) -> (i32, i32) {
    %c0_i32 = arith.constant 0 : i32
    %c0_i32_0 = arith.constant 0 : i32
    %c0_i32_1 = arith.constant 0 : i32
    return %c0_i32, %c0_i32_0 : i32, i32
  }
  func.func @transform_2(%arg0: i32) -> (i32, i32) {
    %c0_i32 = arith.constant 0 : i32
    %c0_i32_0 = arith.constant 0 : i32
    %c0_i32_1 = arith.constant 0 : i32
    return %c0_i32, %c0_i32_0 : i32, i32
  }
  func.func @transform_3(%arg0: i32) -> (i32, i32) {
    %c0_i32 = arith.constant 0 : i32
    %c0_i32_0 = arith.constant 0 : i32
    %c0_i32_1 = arith.constant 0 : i32
    return %c0_i32, %c0_i32_0 : i32, i32
  }
  func.func @transform_4(%arg0: i32) -> (i32, i32) {
    %c0_i32 = arith.constant 0 : i32
    %c0_i32_0 = arith.constant 0 : i32
    %c0_i32_1 = arith.constant 0 : i32
    return %c0_i32, %c0_i32_0 : i32, i32
  }
  func.func @transform_5(%arg0: i32) -> (i32, i32, i32) {
    %c0_i32 = arith.constant 0 : i32
    %c0_i32_0 = arith.constant 0 : i32
    %c0_i32_1 = arith.constant 0 : i32
    return %arg0, %c0_i32, %c0_i32_0 : i32, i32, i32
  }
}

</mosaic_0001>

<llo_original>
// kernel: se_block_forward.1
$region0: #{se_block_forward.1}
  #allocation0 [shape = 'u32[]', space=smem, size = 0x4, offset = 0x4, fixed_abs, tag = 'smem constant byte address 0x4 - core index']
  #allocation1 [shape = 'u32[144,128]{1,0:T(1,128)}', space=vmem, size = 0x12000, scoped, tag = 'internal scratch']
  %s0 = inlined_call_operand.vmem [shape: f32[2,4,256], index: 0, kind: input, shape index: {}]
  %s1 = inlined_call_operand.vmem [shape: f32[4,2], index: 1, kind: input, shape index: {}]
  %s2 = inlined_call_operand.vmem [shape: f32[1,2], index: 2, kind: input, shape index: {}]
  %s3 = inlined_call_operand.vmem [shape: f32[4,2], index: 3, kind: input, shape index: {}]
  %s4 = inlined_call_operand.vmem [shape: f32[4,1], index: 4, kind: input, shape index: {}]
  %s5 = inlined_call_operand.vmem [shape: f32[2,4,256], index: 5, kind: output, shape index: {}]
  %s6 = sld [smem:[#allocation0]]
  $region53: #{se_block_forward.1} parent=0
    _
  %s8 = ssub.s32 1, %s6
  %s9 = scalar_select 0, %s8, %s6
  loop: start=0, step=1, limit=4
  $region2: #{se_block_forward.1} parent=0 // loop_pre_header
    _
  $region3: #{se_block_forward.1} parent=0 // loop_header
    %s11 = sphi 0, %s15
    %p12 = scmp.ge.s32.totalorder %s11, 4
    %s21 = sphi 0, %s23
    %s24 = sphi 0, %s21
    %s25 = sphi 0, %s24
    %s41 = sphi 0, %s25
    %s45 = sphi 0, %s45
    %s47 = sphi 0, %s45
    %s48 = sphi 0, %s47
    %s62 = sphi 0, %s48
    %s66 = sphi 0, %s66
    %s68 = sphi 0, %s66
    %s69 = sphi 0, %s68
    %s83 = sphi 0, %s69
    %s87 = sphi 0, %s87
    %s89 = sphi 0, %s87
    %s90 = sphi 0, %s89
    %s104 = sphi 0, %s90
    %s108 = sphi 0, %s108
    %s110 = sphi 0, %s108
    %s111 = sphi 0, %s110
    %s125 = sphi 0, %s111
    %s131 = sphi 0, %s133
    %s134 = sphi 0, %s131
    %s135 = sphi 0, %s134
    %s151 = sphi 0, %s135
  $region4: #{se_block_forward.1} parent=0 // loop_header_branch
    %14 = sbr.rel (%p12) target = $region8
  $region5: #{se_block_forward.1} parent=0 // loop_body
    %s16 = ssub.s32 %s11, 1
    %s17 = ssub.s32 %s11, 2
    %s18 = sadd.s32 %s11, 1
    %s19 = ssub.s32 %s11, %s18
    %p20 = scmp.eq.s32.totalorder %s19, 0
    %s22 = sadd.s32 %s21, 1
    %s23 = scalar_select %p20, %s21, %s22
    %p26 = pneg %p20
    %p27 = scmp.eq.s32.totalorder %s11, 1
    %p28 = por %p26, %p27
    %p29 = scmp.ne.s32.totalorder %s21, %s24
    %p30 = scmp.eq.s32.totalorder %s11, 0
    %p31 = por %p29, %p30
    %p32 = scmp.ne.s32.totalorder %s21, %s24
    %p33 = scmp.eq.s32.totalorder %s16, 1
    %p34 = por %p32, %p33
    %p35 = scmp.ne.s32.totalorder %s24, %s25
    %p36 = scmp.eq.s32.totalorder %s16, 0
    %p37 = por %p35, %p36
    %p38 = scmp.ne.s32.totalorder %s24, %s25
    %p39 = scmp.eq.s32.totalorder %s17, 1
    %p40 = por %p38, %p39
    %p42 = scmp.ne.s32.totalorder %s25, %s41
    %p43 = scmp.eq.s32.totalorder %s17, 0
    %p44 = por %p42, %p43
    %s46 = sadd.s32 %s45, 1
    %p49 = scmp.eq.s32.totalorder %s11, 1
    %p50 = scmp.ne.s32.totalorder %s45, %s47
    %p51 = scmp.eq.s32.totalorder %s11, 0
    %p52 = por %p50, %p51
    %p53 = scmp.ne.s32.totalorder %s45, %s47
    %p54 = scmp.eq.s32.totalorder %s16, 1
    %p55 = por %p53, %p54
    %p56 = scmp.ne.s32.totalorder %s47, %s48
    %p57 = scmp.eq.s32.totalorder %s16, 0
    %p58 = por %p56, %p57
    %p59 = scmp.ne.s32.totalorder %s47, %s48
    %p60 = scmp.eq.s32.totalorder %s17, 1
    %p61 = por %p59, %p60
    %p63 = scmp.ne.s32.totalorder %s48, %s62
    %p64 = scmp.eq.s32.totalorder %s17, 0
    %p65 = por %p63, %p64
    %s67 = sadd.s32 %s66, 1
    %p70 = scmp.eq.s32.totalorder %s11, 1
    %p71 = scmp.ne.s32.totalorder %s66, %s68
    %p72 = scmp.eq.s32.totalorder %s11, 0
    %p73 = por %p71, %p72
    %p74 = scmp.ne.s32.totalorder %s66, %s68
    %p75 = scmp.eq.s32.totalorder %s16, 1
    %p76 = por %p74, %p75
    %p77 = scmp.ne.s32.totalorder %s68, %s69
    %p78 = scmp.eq.s32.totalorder %s16, 0
    %p79 = por %p77, %p78
    %p80 = scmp.ne.s32.totalorder %s68, %s69
    %p81 = scmp.eq.s32.totalorder %s17, 1
    %p82 = por %p80, %p81
    %p84 = scmp.ne.s32.totalorder %s69, %s83
    %p85 = scmp.eq.s32.totalorder %s17, 0
    %p86 = por %p84, %p85
    %s88 = sadd.s32 %s87, 1
    %p91 = scmp.eq.s32.totalorder %s11, 1
    %p92 = scmp.ne.s32.totalorder %s87, %s89
    %p93 = scmp.eq.s32.totalorder %s11, 0
    %p94 = por %p92, %p93
    %p95 = scmp.ne.s32.totalorder %s87, %s89
    %p96 = scmp.eq.s32.totalorder %s16, 1
    %p97 = por %p95, %p96
    %p98 = scmp.ne.s32.totalorder %s89, %s90
    %p99 = scmp.eq.s32.totalorder %s16, 0
    %p100 = por %p98, %p99
    %p101 = scmp.ne.s32.totalorder %s89, %s90
    %p102 = scmp.eq.s32.totalorder %s17, 1
    %p103 = por %p101, %p102
    %p105 = scmp.ne.s32.totalorder %s90, %s104
    %p106 = scmp.eq.s32.totalorder %s17, 0
    %p107 = por %p105, %p106
    %s109 = sadd.s32 %s108, 1
    %p112 = scmp.eq.s32.totalorder %s11, 1
    %p113 = scmp.ne.s32.totalorder %s108, %s110
    %p114 = scmp.eq.s32.totalorder %s11, 0
    %p115 = por %p113, %p114
    %p116 = scmp.ne.s32.totalorder %s108, %s110
    %p117 = scmp.eq.s32.totalorder %s16, 1
    %p118 = por %p116, %p117
    %p119 = scmp.ne.s32.totalorder %s110, %s111
    %p120 = scmp.eq.s32.totalorder %s16, 0
    %p121 = por %p119, %p120
    %p122 = scmp.ne.s32.totalorder %s110, %s111
    %p123 = scmp.eq.s32.totalorder %s17, 1
    %p124 = por %p122, %p123
    %p126 = scmp.ne.s32.totalorder %s111, %s125
    %p127 = scmp.eq.s32.totalorder %s17, 0
    %p128 = por %p126, %p127
    %s129 = ssub.s32 %s11, %s18
    %p130 = scmp.eq.s32.totalorder %s129, 0
    %s132 = sadd.s32 %s131, 1
    %s133 = scalar_select %p130, %s131, %s132
    %p136 = pneg %p130
    %p137 = scmp.eq.s32.totalorder %s11, 1
    %p138 = por %p136, %p137
    %p139 = scmp.ne.s32.totalorder %s131, %s134
    %p140 = scmp.eq.s32.totalorder %s11, 0
    %p141 = por %p139, %p140
    %p142 = scmp.ne.s32.totalorder %s131, %s134
    %p143 = scmp.eq.s32.totalorder %s16, 1
    %p144 = por %p142, %p143
    %p145 = scmp.ne.s32.totalorder %s134, %s135
    %p146 = scmp.eq.s32.totalorder %s16, 0
    %p147 = por %p145, %p146
    %p148 = scmp.ne.s32.totalorder %s134, %s135
    %p149 = scmp.eq.s32.totalorder %s17, 1
    %p150 = por %p148, %p149
    %p152 = scmp.ne.s32.totalorder %s135, %s151
    %p153 = scmp.eq.s32.totalorder %s17, 0
    %p154 = por %p152, %p153
    %p155 = scmp.le.s32.totalorder 1, %s11
    %p156 = scmp.lt.s32.totalorder %s11, 3
    %p157 = pnand %p155, %p156
    %p158 = pneg %p157
    // Predicated region
    $region9: #{se_block_forward.1} parent=5 // pred_check
      _
    $region10: #{se_block_forward.1} parent=5 // pred_check_branch
      %160 = sbr.rel (%p157) target = $region12
    $region11: #{se_block_forward.1} parent=5 // pred_region
      %s161 = ssub.s32 %s11, 1
      // Predicated region
      $region13: #{se_block_forward.1} parent=11 // pred_check
        %p162 = pneg %p58
      $region14: #{se_block_forward.1} parent=11 // pred_check_branch
        %164 = sbr.rel (%p162) target = $region16
      $region15: #{se_block_forward.1} parent=11 // pred_region
        _
      $region16: #{se_block_forward.1} parent=11 // pred_fallthru
        _
      // Predicated region
      $region17: #{se_block_forward.1} parent=11 // pred_check
        %p165 = pneg %p79
      $region18: #{se_block_forward.1} parent=11 // pred_check_branch
        %167 = sbr.rel (%p165) target = $region20
      $region19: #{se_block_forward.1} parent=11 // pred_region
        _
      $region20: #{se_block_forward.1} parent=11 // pred_fallthru
        _
      // Predicated region
      $region21: #{se_block_forward.1} parent=11 // pred_check
        %p168 = pneg %p100
      $region22: #{se_block_forward.1} parent=11 // pred_check_branch
        %170 = sbr.rel (%p168) target = $region24
      $region23: #{se_block_forward.1} parent=11 // pred_region
        _
      $region24: #{se_block_forward.1} parent=11 // pred_fallthru
        _
      // Predicated region
      $region25: #{se_block_forward.1} parent=11 // pred_check
        %p171 = pneg %p121
      $region26: #{se_block_forward.1} parent=11 // pred_check_branch
        %173 = sbr.rel (%p171) target = $region28
      $region27: #{se_block_forward.1} parent=11 // pred_region
        _
      $region28: #{se_block_forward.1} parent=11 // pred_fallthru
        _
    $region12: #{se_block_forward.1} parent=5 // pred_fallthru
      _
    %p174 = scmp.lt.s32.totalorder %s11, 2
    // Predicated region
    $region29: #{se_block_forward.1} parent=5 // pred_check
      %p175 = pneg %p174
    $region30: #{se_block_forward.1} parent=5 // pred_check_branch
      %177 = sbr.rel (%p175) target = $region32
    $region31: #{se_block_forward.1} parent=5 // pred_region
      // Predicated region
      $region33: #{se_block_forward.1} parent=31 // pred_check
        %p178 = pneg %p31
      $region34: #{se_block_forward.1} parent=31 // pred_check_branch
        %180 = sbr.rel (%p178) target = $region36
      $region35: #{se_block_forward.1} parent=31 // pred_region
        %p181 = scmp.lt.s32.totalorder %s11, 1
        %s182 = scalar_select %p181, %s11, 1
        %s183 = smul.addr %s182, 2
        %s184 = smul.addr %s183, 4
        %s185 = scalar_lea.vmem %s0, %s184
      $region36: #{se_block_forward.1} parent=31 // pred_fallthru
        _
    $region32: #{se_block_forward.1} parent=5 // pred_fallthru
      _
    %p186 = scmp.le.s32.totalorder 1, %s11
    %p187 = scmp.lt.s32.totalorder %s11, 3
    %p188 = pnand %p186, %p187
    %p189 = pneg %p188
    // Predicated region
    $region37: #{se_block_forward.1} parent=5 // pred_check
      _
    $region38: #{se_block_forward.1} parent=5 // pred_check_branch
      %191 = sbr.rel (%p188) target = $region40
    $region39: #{se_block_forward.1} parent=5 // pred_region
      %s192 = ssub.s32 %s11, 1
      %p193 = scmp.lt.s32.totalorder %s16, 1
      %s194 = scalar_select %p193, %s16, 1
      %s195 = smul.addr %s194, 2
      %s196 = smul.addr %s195, 4
      %s197 = scalar_lea.vmem %s0, %s196
      %p198 = pneg %p37
      %p199 = pneg %p34
      %p200 = pneg %p58
      %p201 = pneg %p55
      %p202 = pneg %p79
      %p203 = pneg %p76
      %p204 = pneg %p100
      %p205 = pneg %p97
      %p206 = pneg %p121
      %p207 = pneg %p118
      %p208 = pneg %p147
      %p209 = pneg %p144
      %p210 = scmp.lt.s32.totalorder %s16, 1
      %s211 = scalar_select %p210, %s16, 1
      %s212 = smul.addr %s211, 2
      %s213 = smul.addr %s212, 4
      %s214 = scalar_lea.vmem %s5, %s213
      %p215 = scmp.lt.s32.totalorder %s16, 1
      %s216 = scalar_select %p215, %s16, 1
      %s217 = smul.addr %s216, 2
      %s218 = smul.addr %s217, 4
      %s219 = scalar_lea.vmem %s0, %s218
      %p220 = scmp.lt.s32.totalorder %s16, 1
      %s221 = scalar_select %p220, %s16, 1
      %s222 = smul.addr %s221, 2
      %s223 = smul.addr %s222, 4
      %s224 = scalar_lea.vmem %s5, %s223
      %v225 = vld [vmem:[%s219] sm:$0xff]
      %v227 = vcombine.high %v225, %v225
      %vm229 = vcmask 1043456
      %v230 = vsel %vm229, %v225, 0.0
      %v231 = vsel %vm229, %v227, 0.0
      %v232 = vadd.f32 %v230, %v231
      %233 = vadd.xlane.f32.xlu0 %v232
      %v234 = vpop.xlane.xlu0 %233
      %v235 = vrcp.pop 256.0
      %v236 = vmul.f32 %v234, %v235
      %v237 = vld [vmem:[%s1] sm:$0xf]
      %v238 = vld [vmem:[%s2] sm:$0x1]
      %v239 = vld [vmem:[%s3] sm:$0xf]
      %v240 = vld [vmem:[%s4] sm:$0xf]
      %v241 = vmul.f32 %v237, %v236
      %vm242 = vcmask 11264
      %v243 = vsel %vm242, %v241, 0.0
      %v244 = vrot.slane %v243, 4
      %v245 = vadd.f32 %v243, %v244
      %v246 = vrot.slane %v245, 2
      %v247 = vadd.f32 %v245, %v246
      %v248 = vrot.slane %v247, 1
      %v249 = vadd.f32 %v247, %v248
      %v250 = vadd.f32 %v249, %v238
      %v251 = vmax.f32 %v250, 0.0
      %v252 = vlaneseq
      %v253 = vshrl.u32 %v252, 7
      %v254 = vsub.s32 0, %v253
      %v255 = vrot.slane %v251, %v254
      %v256 = vmul.f32 %v239, %v255
      %v257 = vsel %vm242, %v256, 0.0
      %258 = vadd.xlane.f32.xlu0 %v257
      %v259 = vpop.xlane.xlu0 %258
      %v260 = vadd.f32 %v259, %v240
      %v261 = vand.u32 2147483647, %v260
      %v262 = vsub.f32 0.0, %v261
      %v263 = vmul.f32 %v262, 1.442695
      %v264 = vpow.pop %v263
      %vm265 = vcmp.ge.f32.partialorder %v260, 0.0
      %v266 = vadd.f32 %v264, 1.0
      %v267 = vrcp.pop %v266
      %v268 = vmul.f32 1.0, %v267
      %v269 = vmul.f32 %v264, %v267
      %v270 = vsel %vm265, %v268, %v269
      %272 = vset.pattern.permute.xlu0 0
      %273 = vperm.xlu0 %272, %v270
      %v274 = vpop.permute.xlu0 %273
      %v276 = vunpack.c.l.s4 839922192
      %v277 = vunpack.c.0.s8 %v276
      %v278 = vlaneseq
      %v279 = vshrl.u32 %v278, 7
      %v280 = vsub.s32 %v277, %v279
      %v281 = vrot.slane %v274, %v280
      %v283 = vmul.f32 %v225, %v281
      %284 = vst [vmem:[%s224] sm:$0xff] %v283
      %p285 = scmp.lt.s32.totalorder %s16, 1
      %s286 = scalar_select %p285, %s16, 1
      %s287 = smul.addr %s286, 2
      %s288 = smul.addr %s287, 4
      %s289 = scalar_lea.vmem %s5, %s288
      // Predicated region
      $region41: #{se_block_forward.1} parent=39 // pred_check
        %p290 = pneg %p144
      $region42: #{se_block_forward.1} parent=39 // pred_check_branch
        %292 = sbr.rel (%p290) target = $region44
      $region43: #{se_block_forward.1} parent=39 // pred_region
        _
      $region44: #{se_block_forward.1} parent=39 // pred_fallthru
        _
    $region40: #{se_block_forward.1} parent=5 // pred_fallthru
      _
    %p293 = scmp.le.s32.totalorder 2, %s11
    // Predicated region
    $region45: #{se_block_forward.1} parent=5 // pred_check
      %p294 = pneg %p293
    $region46: #{se_block_forward.1} parent=5 // pred_check_branch
      %296 = sbr.rel (%p294) target = $region48
    $region47: #{se_block_forward.1} parent=5 // pred_region
      %s297 = ssub.s32 %s11, 2
      // Predicated region
      $region49: #{se_block_forward.1} parent=47 // pred_check
        %p298 = pneg %p150
      $region50: #{se_block_forward.1} parent=47 // pred_check_branch
        %300 = sbr.rel (%p298) target = $region52
      $region51: #{se_block_forward.1} parent=47 // pred_region
        %p301 = scmp.lt.s32.totalorder %s17, 1
        %s302 = scalar_select %p301, %s17, 1
        %s303 = smul.addr %s302, 2
        %s304 = smul.addr %s303, 4
        %s305 = scalar_lea.vmem %s5, %s304
      $region52: #{se_block_forward.1} parent=47 // pred_fallthru
        _
    $region48: #{se_block_forward.1} parent=5 // pred_fallthru
      _
  $region6: #{se_block_forward.1} parent=0 // loop_footer
    %s15 = sadd.s32 1, %s11
  $region7: #{se_block_forward.1} parent=0 // loop_footer_branch
    %10 = sbr.rel target = $region3
  $region8: #{se_block_forward.1} parent=0 // loop_exit
    _

</llo_original>
